<compile_context>
chip_gen: v7x
topology: tpu7x:2x2x1
jax: 0.10.0
libtpu: 0.0.40
codegen_flags: <defaults>
</compile_context>

<pallas_src>
import functools

import jax
import jax.numpy as jnp
import numpy as np
from jax import lax
from jax.experimental import pallas as pl
from jax.experimental.pallas import tpu as pltpu


def _vmem_capacity_bytes() -> int:
    """Physical VMEM per TensorCore (128 MiB v5e/v6e, 64 MiB v7x); safe fallback."""
    try:
        cap = int(getattr(pltpu.get_tpu_info(), "vmem_capacity_bytes", 0))
        if cap > 0:
            return cap
    except Exception:
        pass
    return 64 << 20  # conservative (v7x)


def _channel_gate(y_sum, w_ref, *, k_size, period, n_tokens):
    """sigmoid(Conv1d(1,1,k, 'same' zero padding)) of the per-channel token mean.

    y_sum: (Bt, L) f32 per-lane token sums.  Channel of lane l is (l % period).
    When L > period (channel-folded layout; period | L and period is a power of
    two) each channel's sum is spread over L/period lane positions and is folded
    first.  The conv is built from k-1 XLU lane rotations + lane masks (no band
    matrix, no MXU).  Returns the gate in the same periodic lane layout, f32.
    """
    L = y_sum.shape[-1]
    rep = L // period
    y = y_sum
    for r in range(1, rep):                       # fold replicas -> periodic channel sums
        y = y + pltpu.roll(y_sum, shift=r * period, axis=1)
    y = y * (1.0 / n_tokens)                      # channel means, periodic over lanes

    lane = lax.broadcasted_iota(jnp.int32, (1, L), 1)
    # period is a power of two whenever rep > 1 (wrapper guarantees 128 % C == 0).
    lane_c = jnp.bitwise_and(lane, period - 1) if rep > 1 else lane
    pad = (k_size - 1) // 2
    conv = w_ref[pad] * y                         # centre tap: no shift
    for t in range(k_size):                       # tiny static loop over taps
        s = pad - t                               # want y[channel - s], zero outside [0, period)
        if s == 0:
            continue
        shifted = pltpu.roll(y, shift=s % L, axis=1)
        valid = (lane_c >= s) & (lane_c < period + s)
        conv = conv + w_ref[t] * jnp.where(valid, shifted, 0.0)
    return jax.nn.sigmoid(conv)                   # (Bt, L) f32


def _eca1d_slab_kernel(w_ref, x_ref, o_ref, *, k_size, period, n_tokens):
    """Single-pass kernel: (Bt, rows, L) slab -> gated slab.  1 HBM read + 1 write."""
    x = x_ref[...]                                              # (Bt, rows, L)
    y_sum = jnp.sum(x, axis=1, dtype=jnp.float32)               # f32 accumulation
    gate = _channel_gate(y_sum, w_ref, k_size=k_size, period=period, n_tokens=n_tokens)
    o_ref[...] = (x * gate[:, None, :].astype(x.dtype)).astype(o_ref.dtype)


def _eca1d_reduce_kernel(w_ref, x_ref, gate_ref, *, k_size, period, n_tokens,
                         rows_total, tile_rows, ragged):
    """Reduce pass: accumulate per-lane sums into the (1, L) output block and
    turn them into the sigmoid gate on the last row tile."""
    j = pl.program_id(1)

    @pl.when(j == 0)
    def _init():
        gate_ref[...] = jnp.zeros_like(gate_ref)

    x = x_ref[...]                                              # (tile_rows, L)
    if ragged:                                                  # mask garbage rows of last tile
        row = lax.broadcasted_iota(jnp.int32, (x.shape[0], 1), 0)
        x = jnp.where(row < rows_total - j * tile_rows, x, jnp.zeros_like(x))
    gate_ref[...] += jnp.sum(x, axis=0, keepdims=True, dtype=jnp.float32)

    @pl.when(j == pl.num_programs(1) - 1)
    def _finalize():
        gate_ref[...] = _channel_gate(gate_ref[...], w_ref, k_size=k_size,
                                      period=period, n_tokens=n_tokens)


def _eca1d_apply_kernel(x_ref, gate_ref, o_ref):
    """Apply pass: elementwise per-channel gating of one row tile."""
    x = x_ref[...]                                              # (tile_rows, L)
    o_ref[...] = (x * gate_ref[...].astype(x.dtype)).astype(o_ref.dtype)


def eca_layer_1d(x: jax.Array, conv_weight: jax.Array, k_size: int = 3,
                 *, block_rows: int | None = None) -> jax.Array:
    """ECA-1D forward.  x: (B, N, C); conv_weight: (1, 1, k) (PyTorch Conv1d layout).

    block_rows forces the two-pass tiled path with that row-tile size (testing).
    """
    if k_size % 2 != 1:
        raise ValueError("ECA uses an odd k_size (PyTorch 'same'-style padding).")
    b, n, c = x.shape
    w = conv_weight.reshape(k_size).astype(jnp.float32)
    itemsize = jnp.dtype(x.dtype).itemsize

    # ---- layout: fold small power-of-two channel counts into the 128-wide lane
    # dimension so loads and (especially) stores are unmasked, lane-dense vst.
    folded = (c % 128 != 0) and (128 % c == 0) and (n % (128 // c) == 0)
    if folded:
        lanes, rows = 128, (n * c) // 128
        x_k = x.reshape(b, rows, lanes)           # contiguous reshape: no data movement
    else:
        # TODO(synk): channel counts that neither divide nor are divisible by 128
        # (e.g. 96, 192) still take masked stores on the last dim.
        lanes, rows, x_k = c, n, x
    period = c

    # ---- generation-aware VMEM budget (v5e/v6e: 128 MiB physical, v7x: 64 MiB).
    vmem_cap = _vmem_capacity_bytes()
    vmem_limit_cap = vmem_cap - vmem_cap // 8     # ~112 MiB v5e/v6e, ~56 MiB v7x
    headroom = 8 << 20

    per_batch_bytes = rows * lanes * itemsize
    f32_temp = rows * lanes * 4 if itemsize < 4 else 0    # possible f32 reduce temp
    slab_cost = 4 * per_batch_bytes + f32_temp            # in+out double-buffered (+temp)

    if block_rows is None and slab_cost + headroom <= vmem_limit_cap:
        # ---------------- single-pass slab path: 1 HBM read + 1 write ----------------
        bt_budget = max(1, (vmem_limit_cap - headroom) // slab_cost)
        bt_target = max(1, -(-(2 << 20) // per_batch_bytes))  # aim >= ~2 MiB per DMA block
        bt_cap = min(b, bt_budget, bt_target)
        bt = max(d for d in range(1, bt_cap + 1) if b % d == 0)  # uniform batch blocks
        vmem_limit = int(min(max(bt * slab_cost + headroom, 32 << 20), vmem_limit_cap))

        kernel = functools.partial(_eca1d_slab_kernel, k_size=k_size,
                                   period=period, n_tokens=n)
        out = pl.pallas_call(
            kernel,
            out_shape=jax.ShapeDtypeStruct((b, rows, lanes), x.dtype),
            grid=(b // bt,),
            in_specs=[
                pl.BlockSpec(memory_space=pltpu.MemorySpace.SMEM),          # conv taps
                pl.BlockSpec((bt, rows, lanes), lambda i: (i, 0, 0)),
            ],
            out_specs=pl.BlockSpec((bt, rows, lanes), lambda i: (i, 0, 0)),
            compiler_params=pltpu.CompilerParams(
                dimension_semantics=("parallel",),
                vmem_limit_bytes=vmem_limit),
        )(w, x_k)
        return out.reshape(b, n, c) if folded else out

    # ---------------- two-pass tiled path (large slabs): reduce -> apply ----------------
    row_align = 8 * max(1, 4 // itemsize)         # sublane packing: 8 f32 / 16 bf16 / 32 int8
    if block_rows is not None:
        tile_rows = min(rows, block_rows)
        if tile_rows < rows:
            tile_rows = max(row_align, (tile_rows // row_align) * row_align)
    else:
        tile_budget = min((vmem_limit_cap - headroom) // 4, 16 << 20)
        tile_rows = (tile_budget // (lanes * itemsize)) // row_align * row_align
        tile_rows = max(row_align, min(rows, tile_rows))
    n_tiles = pl.cdiv(rows, tile_rows)
    ragged = (rows % tile_rows) != 0
    tile_bytes = tile_rows * lanes * itemsize
    vmem_limit = int(min(max(4 * tile_bytes + headroom, 32 << 20), vmem_limit_cap))

    # Pass 1: per-batch gate (B, 1, L) f32 (accumulator output across row tiles).
    reduce_kernel = functools.partial(
        _eca1d_reduce_kernel, k_size=k_size, period=period, n_tokens=n,
        rows_total=rows, tile_rows=tile_rows, ragged=ragged)
    gate = pl.pallas_call(
        reduce_kernel,
        out_shape=jax.ShapeDtypeStruct((b, 1, lanes), jnp.float32),
        grid=(b, n_tiles),
        in_specs=[
            pl.BlockSpec(memory_space=pltpu.MemorySpace.SMEM),              # conv taps
            pl.BlockSpec((None, tile_rows, lanes), lambda bi, j: (bi, j, 0)),
        ],
        out_specs=pl.BlockSpec((None, 1, lanes), lambda bi, j: (bi, 0, 0)),
        compiler_params=pltpu.CompilerParams(
            dimension_semantics=("parallel", "arbitrary"),
            vmem_limit_bytes=vmem_limit),
    )(w, x_k)

    # Pass 2: fully parallel gating sweep (both axes "parallel" -> v7x megacore).
    out = pl.pallas_call(
        _eca1d_apply_kernel,
        out_shape=jax.ShapeDtypeStruct((b, rows, lanes), x.dtype),
        grid=(b, n_tiles),
        in_specs=[
            pl.BlockSpec((None, tile_rows, lanes), lambda bi, j: (bi, j, 0)),
            pl.BlockSpec((None, 1, lanes), lambda bi, j: (bi, 0, 0)),
        ],
        out_specs=pl.BlockSpec((None, tile_rows, lanes), lambda bi, j: (bi, j, 0)),
        compiler_params=pltpu.CompilerParams(
            dimension_semantics=("parallel", "parallel"),
            vmem_limit_bytes=vmem_limit),
    )(x_k, gate)
    return out.reshape(b, n, c) if folded else out


def _eca_reference(x, conv_weight, k_size=3):
    """Pure-JAX reference mirroring the PyTorch module."""
    w = conv_weight.reshape(k_size).astype(jnp.float32)
    pad = (k_size - 1) // 2
    y = jnp.mean(x.astype(jnp.float32), axis=1)                   # (B, C)
    y_pad = jnp.pad(y, ((0, 0), (pad, pad)))
    conv = sum(w[t] * y_pad[:, t:t + x.shape[2]] for t in range(k_size))
    gate = jax.nn.sigmoid(conv)[:, None, :]                       # (B, 1, C)
    return (x * gate).astype(x.dtype)


if __name__ == "__main__":
    key = jax.random.PRNGKey(0)
    kx1, kx2, kx3, kx4, kw1, kw2 = jax.random.split(key, 6)

    # 1) f32, C = 128 (lane-dense): single-pass slab path, 2 batch slabs per grid step.
    B, N, C, K = 2, 64, 128, 3
    x = jax.random.normal(kx1, (B, N, C), dtype=jnp.float32)
    w = 0.1 * jax.random.normal(kw1, (1, 1, K), dtype=jnp.float32)
    ref = _eca_reference(x, w, k_size=K)
    out = jax.block_until_ready(eca_layer_1d(x, w, k_size=K))
    np.testing.assert_allclose(np.asarray(out), np.asarray(ref), rtol=1e-5, atol=1e-5)

    # 2) Two-pass tiled path with a ragged last row tile (N=56, row tile 16).
    x2 = jax.random.normal(kx2, (2, 56, 128), dtype=jnp.float32)
    ref2 = _eca_reference(x2, w, k_size=K)
    out2 = jax.block_until_ready(eca_layer_1d(x2, w, k_size=K, block_rows=16))
    np.testing.assert_allclose(np.asarray(out2), np.asarray(ref2), rtol=1e-5, atol=1e-5)

    # 3) C = 64 (< 128): channel-folded lane-dense layout, k_size = 5.
    K5 = 5
    x3 = jax.random.normal(kx3, (2, 32, 64), dtype=jnp.float32)
    w5 = 0.1 * jax.random.normal(kw2, (1, 1, K5), dtype=jnp.float32)
    ref3 = _eca_reference(x3, w5, k_size=K5)
    out3 = jax.block_until_ready(eca_layer_1d(x3, w5, k_size=K5))
    np.testing.assert_allclose(np.asarray(out3), np.asarray(ref3), rtol=1e-5, atol=1e-5)

    # 4) bf16 input: f32 accumulation for the mean, bf16 gate multiply.
    x4 = jax.random.normal(kx4, (2, 32, 128), dtype=jnp.float32).astype(jnp.bfloat16)
    ref4 = _eca_reference(x4, w, k_size=K)
    out4 = jax.block_until_ready(eca_layer_1d(x4, w, k_size=K))
    np.testing.assert_allclose(np.asarray(out4.astype(jnp.float32)),
                               np.asarray(ref4.astype(jnp.float32)),
                               rtol=2e-2, atol=2e-2)

    print("KERNEL_OK")
</pallas_src>

<mosaic_0001>
module attributes {stable_mosaic.version = 11 : i64} {
  func.func @_eca1d_slab_kernel(%arg0: i32, %arg1: memref<3xf32, #tpu.memory_space<smem>>, %arg2: memref<2x64x128xf32, #tpu.memory_space<vmem>>, %arg3: memref<2x64x128xf32, #tpu.memory_space<vmem>>) attributes {dimension_semantics = [#tpu.dimension_semantics<parallel>], iteration_bounds = array<i64: 1>, scalar_prefetch = 0 : i64, scratch_operands = 0 : i64, tpu.core_type = #tpu.core_type<tc>, window_params = [{transform_indices = @transform_0, window_bounds = array<i64: 3>}, {transform_indices = @transform_1, window_bounds = array<i64: 2, 64, 128>}, {transform_indices = @transform_2, window_bounds = array<i64: 2, 64, 128>}]} {
    %c0 = arith.constant 0 : index
    %c0_0 = arith.constant 0 : index
    %c0_1 = arith.constant 0 : index
    %0 = vector.load %arg2[%c0, %c0_0, %c0_1] : memref<2x64x128xf32, #tpu.memory_space<vmem>>, vector<2x64x128xf32>
    %cst = arith.constant dense<0.000000e+00> : vector<2x128xf32>
    %1 = vector.multi_reduction <add>, %0, %cst [1] : vector<2x64x128xf32> to vector<2x128xf32>
    %cst_2 = arith.constant 1.562500e-02 : f32
    %2 = vector.broadcast %cst_2 : f32 to vector<2x128xf32>
    %3 = arith.mulf %1, %2 : vector<2x128xf32>
    %4 = tpu.iota {dimensions = array<i32: 1>} : vector<1x128xi32>
    %c1 = arith.constant 1 : index
    %5 = memref.load %arg1[%c1] : memref<3xf32, #tpu.memory_space<smem>>
    %6 = vector.broadcast %5 : f32 to vector<2x128xf32>
    %7 = arith.mulf %6, %3 : vector<2x128xf32>
    %c1_i32 = arith.constant 1 : i32
    %8 = tpu.dynamic_rotate %3 by %c1_i32 dim 1 : vector<2x128xf32>, i32 -> vector<2x128xf32>
    %c1_i32_3 = arith.constant 1 : i32
    %9 = vector.broadcast %c1_i32_3 : i32 to vector<1x128xi32>
    %10 = arith.cmpi sge, %4, %9 : vector<1x128xi32>
    %c129_i32 = arith.constant 129 : i32
    %11 = vector.broadcast %c129_i32 : i32 to vector<1x128xi32>
    %12 = arith.cmpi slt, %4, %11 : vector<1x128xi32>
    %13 = arith.andi %10, %12 : vector<1x128xi1>
    %c0_4 = arith.constant 0 : index
    %14 = memref.load %arg1[%c0_4] : memref<3xf32, #tpu.memory_space<smem>>
    %cst_5 = arith.constant 0.000000e+00 : f32
    %15 = vector.shape_cast %13 : vector<1x128xi1> to vector<1x128xi1>
    %16 = vector.broadcast %15 : vector<1x128xi1> to vector<2x128xi1>
    %17 = vector.broadcast %cst_5 : f32 to vector<2x128xf32>
    %18 = arith.select %16, %8, %17 : vector<2x128xi1>, vector<2x128xf32>
    %19 = vector.broadcast %14 : f32 to vector<2x128xf32>
    %20 = arith.mulf %19, %18 : vector<2x128xf32>
    %21 = arith.addf %7, %20 : vector<2x128xf32>
    %c127_i32 = arith.constant 127 : i32
    %22 = tpu.dynamic_rotate %3 by %c127_i32 dim 1 : vector<2x128xf32>, i32 -> vector<2x128xf32>
    %c-1_i32 = arith.constant -1 : i32
    %23 = vector.broadcast %c-1_i32 : i32 to vector<1x128xi32>
    %24 = arith.cmpi sge, %4, %23 : vector<1x128xi32>
    %c127_i32_6 = arith.constant 127 : i32
    %25 = vector.broadcast %c127_i32_6 : i32 to vector<1x128xi32>
    %26 = arith.cmpi slt, %4, %25 : vector<1x128xi32>
    %27 = arith.andi %24, %26 : vector<1x128xi1>
    %c2 = arith.constant 2 : index
    %28 = memref.load %arg1[%c2] : memref<3xf32, #tpu.memory_space<smem>>
    %cst_7 = arith.constant 0.000000e+00 : f32
    %29 = vector.shape_cast %27 : vector<1x128xi1> to vector<1x128xi1>
    %30 = vector.broadcast %29 : vector<1x128xi1> to vector<2x128xi1>
    %31 = vector.broadcast %cst_7 : f32 to vector<2x128xf32>
    %32 = arith.select %30, %22, %31 : vector<2x128xi1>, vector<2x128xf32>
    %33 = vector.broadcast %28 : f32 to vector<2x128xf32>
    %34 = arith.mulf %33, %32 : vector<2x128xf32>
    %35 = arith.addf %21, %34 : vector<2x128xf32>
    %36 = arith.negf %35 : vector<2x128xf32>
    %37 = math.exp %36 : vector<2x128xf32>
    %cst_8 = arith.constant 1.000000e+00 : f32
    %38 = vector.broadcast %cst_8 : f32 to vector<2x128xf32>
    %39 = arith.addf %38, %37 : vector<2x128xf32>
    %40 = arith.divf %38, %39 : vector<2x128xf32>
    %41 = vector.shape_cast %40 : vector<2x128xf32> to vector<2x1x128xf32>
    %42 = vector.broadcast %41 : vector<2x1x128xf32> to vector<2x64x128xf32>
    %43 = arith.mulf %0, %42 : vector<2x64x128xf32>
    %c0_9 = arith.constant 0 : index
    %c0_10 = arith.constant 0 : index
    %c0_11 = arith.constant 0 : index
    %44 = vector.load %arg3[%c0_9, %c0_10, %c0_11] : memref<2x64x128xf32, #tpu.memory_space<vmem>>, vector<2x64x128xf32>
    tpu.vector_store %arg3[%c0_9, %c0_10, %c0_11], %43 {strides = array<i32>} : memref<2x64x128xf32, #tpu.memory_space<vmem>>, vector<2x64x128xf32>,
    return
  }
  func.func @transform_0(%arg0: i32) -> i32 {
    %c0_i32 = arith.constant 0 : i32
    %c0_i32_0 = arith.constant 0 : i32
    return %c0_i32 : i32
  }
  func.func @transform_1(%arg0: i32) -> (i32, i32, i32) {
    %c0_i32 = arith.constant 0 : i32
    %c0_i32_0 = arith.constant 0 : i32
    %c0_i32_1 = arith.constant 0 : i32
    return %arg0, %c0_i32, %c0_i32_0 : i32, i32, i32
  }
  func.func @transform_2(%arg0: i32) -> (i32, i32, i32) {
    %c0_i32 = arith.constant 0 : i32
    %c0_i32_0 = arith.constant 0 : i32
    %c0_i32_1 = arith.constant 0 : i32
    return %arg0, %c0_i32, %c0_i32_0 : i32, i32, i32
  }
}

</mosaic_0001>

<llo_original>
// kernel: tpu_custom_call.1
$region0: #{tpu_custom_call.1}
  #allocation0 [shape = 'u32[]', space=smem, size = 0x4, offset = 0x4, fixed_abs, tag = 'smem constant byte address 0x4 - core index']
  #allocation1 [shape = 'u32[144,128]{1,0:T(1,128)}', space=vmem, size = 0x12000, scoped, tag = 'internal scratch']
  %s0 = inlined_call_operand.hbm [shape: f32[3], index: 0, kind: input, shape index: {}]
  %s1 = inlined_call_operand.hbm [shape: f32[2,64,128], index: 1, kind: input, shape index: {}]
  %s2 = inlined_call_operand.hbm [shape: f32[2,64,128], index: 2, kind: output, shape index: {}]
  %s3 = sld [smem:[#allocation0]]
  $region26: #{tpu_custom_call.1} parent=0
    _
  %s5 = ssub.s32 1, %s3
  %s6 = scalar_select 0, %s5, %s3
  $region1: #{tpu_custom_call.1} parent=0
    #allocation2 [shape = 'u8[512]{0}', space=smem, size = 0x200, scoped, tag = 'input window, operand 0, single buffered']
    #allocation3 [shape = 's32[1]{0}', space=sflag, size = 0x4, scoped, tag = 'scoped memory for tpu_custom_call.1']
    #allocation4 [shape = 's32[1]{0}', space=sflag, size = 0x4, scoped, tag = 'scoped memory for tpu_custom_call.1']
    #allocation5 [shape = 's32[1]{0}', space=sflag, size = 0x4, scoped, tag = 'scoped memory for tpu_custom_call.1']
    #allocation6 [shape = 'u8[65536]{0}', space=vmem, size = 0x10000, scoped, tag = 'input window, operand 1, single buffered']
    #allocation7 [shape = 'u8[65536]{0}', space=vmem, size = 0x10000, scoped, tag = 'output window, operand 0, single buffered']
    %7 = vsyncpa [#allocation5], 0
    %8 = vsyncpa [#allocation3], 0
    %9 = vsyncpa [#allocation4], 0
    // Predicated region
    $region2: #{tpu_custom_call.1} parent=1 // pred_check
      _
    $region3: #{tpu_custom_call.1} parent=1 // pred_check_branch
      %11 = sbr.rel (0) target = $region5
    $region4: #{tpu_custom_call.1} parent=1 // pred_region
      %s13 = ssub.s32 16, 16
      %14 = vsyncadd [#allocation5], %s13
      %17 = dma.hbm_to_smem %s0, 16, [#allocation2], [#allocation5]
    $region5: #{tpu_custom_call.1} parent=1 // pred_fallthru
      _
    // Predicated region
    $region6: #{tpu_custom_call.1} parent=1 // pred_check
      _
    $region7: #{tpu_custom_call.1} parent=1 // pred_check_branch
      %19 = sbr.rel (0) target = $region9
    $region8: #{tpu_custom_call.1} parent=1 // pred_region
      %s21 = ssub.s32 2048, 2048
      %22 = vsyncadd [#allocation3], %s21
      %s23 = sshll.u32 [#allocation6], 4
      %s24 = int_to_ptr.vmem [resolvable:$true] %s23
      %29 = dma.hbm_to_vmem [thread:$0]  %s1, 2048, %s24, [#allocation3], 128, 128, 8
    $region9: #{tpu_custom_call.1} parent=1 // pred_fallthru
      _
    // Predicated region
    $region10: #{tpu_custom_call.1} parent=1 // pred_check
      _
    $region11: #{tpu_custom_call.1} parent=1 // pred_check_branch
      %31 = sbr.rel (0) target = $region13
    $region12: #{tpu_custom_call.1} parent=1 // pred_region
      %32 = dma.done [#allocation5], 16
    $region13: #{tpu_custom_call.1} parent=1 // pred_fallthru
      _
    // Predicated region
    $region14: #{tpu_custom_call.1} parent=1 // pred_check
      _
    $region15: #{tpu_custom_call.1} parent=1 // pred_check_branch
      %34 = sbr.rel (0) target = $region17
    $region16: #{tpu_custom_call.1} parent=1 // pred_region
      %35 = dma.done [#allocation3], 2048
    $region17: #{tpu_custom_call.1} parent=1 // pred_fallthru
      _
    %36 = sfence
    %v37 = vld [vmem:[#allocation6] sm:$0xff]
    %v38 = vld [vmem:[#allocation6 + $0x8] sm:$0xff]
    %v39 = vld [vmem:[#allocation6 + $0x10] sm:$0xff]
    %v40 = vld [vmem:[#allocation6 + $0x18] sm:$0xff]
    %v41 = vld [vmem:[#allocation6 + $0x20] sm:$0xff]
    %v42 = vld [vmem:[#allocation6 + $0x28] sm:$0xff]
    %v43 = vld [vmem:[#allocation6 + $0x30] sm:$0xff]
    %v44 = vld [vmem:[#allocation6 + $0x38] sm:$0xff]
    %v45 = vld [vmem:[#allocation6 + $0x40] sm:$0xff]
    %v46 = vld [vmem:[#allocation6 + $0x48] sm:$0xff]
    %v47 = vld [vmem:[#allocation6 + $0x50] sm:$0xff]
    %v48 = vld [vmem:[#allocation6 + $0x58] sm:$0xff]
    %v49 = vld [vmem:[#allocation6 + $0x60] sm:$0xff]
    %v50 = vld [vmem:[#allocation6 + $0x68] sm:$0xff]
    %v51 = vld [vmem:[#allocation6 + $0x70] sm:$0xff]
    %v52 = vld [vmem:[#allocation6 + $0x78] sm:$0xff]
    %v53 = vadd.f32 %v37, %v38
    %v54 = vadd.f32 %v53, %v39
    %v55 = vadd.f32 %v54, %v40
    %v56 = vadd.f32 %v55, %v41
    %v57 = vadd.f32 %v56, %v42
    %v58 = vadd.f32 %v57, %v43
    %v59 = vadd.f32 %v58, %v44
    %v60 = vrot.slane %v59, 4
    %v61 = vadd.f32 %v59, %v60
    %v62 = vrot.slane %v61, 2
    %v63 = vadd.f32 %v61, %v62
    %v64 = vrot.slane %v63, 1
    %v65 = vadd.f32 %v63, %v64
    %v66 = vadd.f32 %v45, %v46
    %v67 = vadd.f32 %v66, %v47
    %v68 = vadd.f32 %v67, %v48
    %v69 = vadd.f32 %v68, %v49
    %v70 = vadd.f32 %v69, %v50
    %v71 = vadd.f32 %v70, %v51
    %v72 = vadd.f32 %v71, %v52
    %v73 = vrot.slane %v72, 4
    %v74 = vadd.f32 %v72, %v73
    %v75 = vrot.slane %v74, 2
    %v76 = vadd.f32 %v74, %v75
    %v77 = vrot.slane %v76, 1
    %v78 = vadd.f32 %v76, %v77
    %v79 = vmul.f32 %v65, 0.015625
    %v80 = vmul.f32 %v78, 0.015625
    %v81 = vlaneseq
    %v82 = vand.u32 %v81, 127
    %s83 = sld [smem:[#allocation2 + $0x1]]
    %v84 = vstv %s83
    %v85 = vmul.f32 %v84, %v79
    %v86 = vmul.f32 %v84, %v80
    %vm89 = vcmask 1041409
    %v90 = vsel %vm89, %v80, %v79
    %92 = vrot.lane.b32.xlu0 %v90, 1
    %v93 = vpop.permute.xlu0 %92
    %vm94 = vcmp.ge.s32.totalorder %v82, 1
    %vm95 = vcmp.lt.s32.totalorder %v82, 129
    %vm96 = vmand %vm94, %vm95
    %s97 = sld [smem:[#allocation2]]
    %v98 = vsel %vm96, 1, 0
    %vm99 = vcmp.eq.s32.totalorder %v98, 1
    %v100 = vsel %vm99, %v93, 0.0
    %v101 = vstv %s97
    %v102 = vmul.f32 %v101, %v100
    %v104 = vrot.slane %v102, 1
    %v107 = vadd.f32 %v85, %v102
    %v108 = vadd.f32 %v86, %v104
    %109 = vrot.lane.b32.xlu0 %v90, 127
    %v110 = vpop.permute.xlu0 %109
    %vm111 = vcmp.ge.s32.totalorder %v82, 4294967295
    %vm112 = vcmp.lt.s32.totalorder %v82, 127
    %vm113 = vmand %vm111, %vm112
    %s114 = sld [smem:[#allocation2 + $0x2]]
    %v115 = vsel %vm113, 1, 0
    %vm116 = vcmp.eq.s32.totalorder %v115, 1
    %v117 = vsel %vm116, %v110, 0.0
    %v118 = vstv %s114
    %v119 = vmul.f32 %v118, %v117
    %v121 = vrot.slane %v119, 1
    %v124 = vadd.f32 %v107, %v119
    %v125 = vadd.f32 %v108, %v121
    %v126 = vxor.u32 %v124, 2147483648
    %v127 = vxor.u32 %v125, 2147483648
    %v128 = vmul.f32 %v126, 1.442695
    %v129 = vpow.pop %v128
    %v130 = vmul.f32 %v127, 1.442695
    %v131 = vpow.pop %v130
    %v132 = vadd.f32 %v129, 1.0
    %v133 = vadd.f32 %v131, 1.0
    %v134 = vrcp.pop %v132
    %v135 = vmul.f32 1.0, %v134
    %v136 = vrcp.pop %v133
    %v137 = vmul.f32 1.0, %v136
    %v138 = vlaneseq
    %v139 = vshrl.u32 %v138, 7
    %v140 = vsub.s32 0, %v139
    %v141 = vrot.slane %v135, %v140
    %v142 = vlaneseq
    %v143 = vshrl.u32 %v142, 7
    %v144 = vsub.s32 0, %v143
    %v145 = vrot.slane %v137, %v144
    %v146 = vmul.f32 %v37, %v141
    %v147 = vmul.f32 %v38, %v141
    %v148 = vmul.f32 %v39, %v141
    %v149 = vmul.f32 %v40, %v141
    %v150 = vmul.f32 %v41, %v141
    %v151 = vmul.f32 %v42, %v141
    %v152 = vmul.f32 %v43, %v141
    %v153 = vmul.f32 %v44, %v141
    %v154 = vmul.f32 %v45, %v145
    %v155 = vmul.f32 %v46, %v145
    %v156 = vmul.f32 %v47, %v145
    %v157 = vmul.f32 %v48, %v145
    %v158 = vmul.f32 %v49, %v145
    %v159 = vmul.f32 %v50, %v145
    %v160 = vmul.f32 %v51, %v145
    %v161 = vmul.f32 %v52, %v145
    %162 = vst [vmem:[#allocation7] sm:$0xff] %v146
    %163 = vst [vmem:[#allocation7 + $0x8] sm:$0xff] %v147
    %164 = vst [vmem:[#allocation7 + $0x10] sm:$0xff] %v148
    %165 = vst [vmem:[#allocation7 + $0x18] sm:$0xff] %v149
    %166 = vst [vmem:[#allocation7 + $0x20] sm:$0xff] %v150
    %167 = vst [vmem:[#allocation7 + $0x28] sm:$0xff] %v151
    %168 = vst [vmem:[#allocation7 + $0x30] sm:$0xff] %v152
    %169 = vst [vmem:[#allocation7 + $0x38] sm:$0xff] %v153
    %170 = vst [vmem:[#allocation7 + $0x40] sm:$0xff] %v154
    %171 = vst [vmem:[#allocation7 + $0x48] sm:$0xff] %v155
    %172 = vst [vmem:[#allocation7 + $0x50] sm:$0xff] %v156
    %173 = vst [vmem:[#allocation7 + $0x58] sm:$0xff] %v157
    %174 = vst [vmem:[#allocation7 + $0x60] sm:$0xff] %v158
    %175 = vst [vmem:[#allocation7 + $0x68] sm:$0xff] %v159
    %176 = vst [vmem:[#allocation7 + $0x70] sm:$0xff] %v160
    %177 = vst [vmem:[#allocation7 + $0x78] sm:$0xff] %v161
    // Predicated region
    $region18: #{tpu_custom_call.1} parent=1 // pred_check
      _
    $region19: #{tpu_custom_call.1} parent=1 // pred_check_branch
      %179 = sbr.rel (0) target = $region21
    $region20: #{tpu_custom_call.1} parent=1 // pred_region
      %s181 = ssub.s32 2048, 2048
      %182 = vsyncadd [#allocation4], %s181
      %s183 = sshll.u32 [#allocation7], 4
      %s184 = int_to_ptr.vmem [resolvable:$true] %s183
      %189 = dma.vmem_to_hbm [thread:$0]  %s184, 2048, %s2, [#allocation4], 128, 128, 8
    $region21: #{tpu_custom_call.1} parent=1 // pred_fallthru
      _
    // Predicated region
    $region22: #{tpu_custom_call.1} parent=1 // pred_check
      _
    $region23: #{tpu_custom_call.1} parent=1 // pred_check_branch
      %191 = sbr.rel (0) target = $region25
    $region24: #{tpu_custom_call.1} parent=1 // pred_region
      %192 = dma.done [#allocation4], 2048
    $region25: #{tpu_custom_call.1} parent=1 // pred_fallthru
      _
    %193 = vsyncpa [#allocation3], 1
    %194 = vsyncpa [#allocation4], 1
    %195 = vsyncpa [#allocation5], 1

</llo_original>
